<compile_context>
chip_gen: v5e
topology: v5e:2x2
jax: 0.10.0
libtpu: 0.0.40
codegen_flags: <defaults>
</compile_context>

<pallas_src>
from functools import partial

import jax
import jax.numpy as jnp
from jax.experimental import pallas as pl
from jax.experimental.pallas import tpu as pltpu

NUM_FEATURES = 3
HIDDEN = 100            # logical hidden width (nn.Linear(3, 100))
HPAD = 128              # per-branch padded hidden width
HTOT = 2 * HPAD         # both branches stacked on sublanes -> 256
FEAT_ROWS = 8           # packed feature rows: l0, l1, ss, pr, ones, 3x pad
LANE = 128
TILE_M_MAX = 8192       # lane-tile width cap (v7x-VMEM-safe; fine on v5e/v6e)


def _round_up(x, m):
    return (x + m - 1) // m * m


def _cdiv(a, b):
    return (a + b - 1) // b


def _choose_tiling(M):
    """Pick (tm, Mp): lane-tile width and padded total lane count."""
    Mp0 = _round_up(max(M, 1), LANE)
    if Mp0 <= LANE:
        return LANE, LANE
    # >= 2 grid steps (so "parallel" can shard across v7x's 2 TensorCores)
    # and each tile <= TILE_M_MAX (keeps the (256, tm) intermediate bounded).
    n_tiles = max(2, _cdiv(Mp0, TILE_M_MAX))
    tm = min(TILE_M_MAX, _round_up(_cdiv(Mp0, n_tiles), LANE))
    Mp = _round_up(Mp0, tm)
    return tm, Mp


# ------------------------------- kernel -------------------------------------
def _stacker_kernel(x_ref, w1_ref, w2_ref, out_ref, *, hidden_dtype):
    """Fused two-branch MLP.

    x_ref  : (8, tm)    rows = [logits0, logits1, str_sim, prior, 1, 0, 0, 0]
    w1_ref : (256, 8)   desc W1 in sublanes 0..127, men W1 in 128..255,
                        layer-1 biases folded into the ones column.
    w2_ref : (2, 256)   block-diagonal W2, layer-2 biases folded into the
                        constant-1 hidden units.
    out_ref: (2, tm)    row 0 = desc output, row 1 = men output.
    """
    # Layer 1 on the MXU (K = 8); only the relu stays on the VPU.
    h = jnp.dot(w1_ref[...], x_ref[...], preferred_element_type=jnp.float32)
    h = jnp.maximum(h, 0.0).astype(hidden_dtype)      # (256, tm)
    # Fused layer 2: one (2, 256) @ (256, tm) matmul, lane-dense output store.
    w2 = w2_ref[...].astype(hidden_dtype)
    out_ref[...] = jnp.dot(w2, h, preferred_element_type=jnp.float32)


# --------------------------- parameter handling ------------------------------
def _init_linear(key, fan_in, fan_out):
    """Deterministic nn.Linear-style init; weight stored as (in, out)."""
    kw, kb = jax.random.split(key)
    bound = 1.0 / jnp.sqrt(jnp.float32(fan_in))
    w = jax.random.uniform(kw, (fan_in, fan_out), jnp.float32, -bound, bound)
    b = jax.random.uniform(kb, (1, fan_out), jnp.float32, -bound, bound)
    return w, b


def init_stacker_params(key):
    k1, k2, k3, k4 = jax.random.split(key, 4)
    men_w1, men_b1 = _init_linear(k1, NUM_FEATURES, HIDDEN)
    men_w2, men_b2 = _init_linear(k2, HIDDEN, 1)
    desc_w1, desc_b1 = _init_linear(k3, NUM_FEATURES, HIDDEN)
    desc_w2, desc_b2 = _init_linear(k4, HIDDEN, 1)
    return dict(men=(men_w1, men_b1, men_w2, men_b2),
                desc=(desc_w1, desc_b1, desc_w2, desc_b2))


def pack_stacker_params(params):
    """Pack both branches into the (256, 8) / (2, 256) kernel weights.

    Feature-row mapping of X: 0=logits0, 1=logits1, 2=str_sim, 3=prior, 4=ones.
    desc branch consumes [logits0, str_sim, prior]; men branch
    [logits1, str_sim, prior].  Biases are folded via the ones row and
    constant-1 hidden units (relu(1) == 1).  Call ONCE at init, not per step.
    """
    desc_w1, desc_b1, desc_w2, desc_b2 = params["desc"]
    men_w1, men_b1, men_w2, men_b2 = params["men"]

    w1 = jnp.zeros((HTOT, FEAT_ROWS), jnp.float32)
    # desc branch (sublanes 0..HIDDEN-1)
    w1 = w1.at[:HIDDEN, 0].set(desc_w1[0, :])     # weight on logits0
    w1 = w1.at[:HIDDEN, 2].set(desc_w1[1, :])     # weight on str_sim
    w1 = w1.at[:HIDDEN, 3].set(desc_w1[2, :])     # weight on prior
    w1 = w1.at[:HIDDEN, 4].set(desc_b1[0])        # bias via ones row
    w1 = w1.at[HIDDEN, 4].set(1.0)                # constant-1 unit (desc b2)
    # men branch (sublanes HPAD..HPAD+HIDDEN-1)
    w1 = w1.at[HPAD:HPAD + HIDDEN, 1].set(men_w1[0, :])   # weight on logits1
    w1 = w1.at[HPAD:HPAD + HIDDEN, 2].set(men_w1[1, :])
    w1 = w1.at[HPAD:HPAD + HIDDEN, 3].set(men_w1[2, :])
    w1 = w1.at[HPAD:HPAD + HIDDEN, 4].set(men_b1[0])
    w1 = w1.at[HPAD + HIDDEN, 4].set(1.0)                 # constant-1 (men b2)

    w2 = jnp.zeros((2, HTOT), jnp.float32)
    w2 = w2.at[0, :HIDDEN].set(desc_w2[:, 0])
    w2 = w2.at[0, HIDDEN].set(desc_b2[0, 0])
    w2 = w2.at[1, HPAD:HPAD + HIDDEN].set(men_w2[:, 0])
    w2 = w2.at[1, HPAD + HIDDEN].set(men_b2[0, 0])
    return w1, w2


# ------------------------------- forward -------------------------------------
@partial(jax.jit, static_argnames=("hidden_dtype",))
def stacker_forward(packed, logits0, logits1, str_sim, prior,
                    hidden_dtype=jnp.float32):
    """Mirrors Stacker.forward; logits0/logits1/str_sim: (B, N), prior: (B*N,)."""
    w1, w2 = packed
    M = logits0.size
    tm, Mp = _choose_tiling(M)

    # Build the single (8, Mp) packed RHS: one stack + one pad, reused as the
    # MXU operand directly (no per-input padding, no in-kernel assembly).
    feats = jnp.stack(
        [logits0.reshape(-1), logits1.reshape(-1),
         str_sim.reshape(-1), prior.reshape(-1)], axis=0).astype(jnp.float32)
    ones = jnp.ones((1, M), jnp.float32)
    zeros = jnp.zeros((FEAT_ROWS - 5, M), jnp.float32)
    x = jnp.concatenate([feats, ones, zeros], axis=0)          # (8, M)
    if Mp > M:
        x = jnp.pad(x, ((0, 0), (0, Mp - M)))                  # (8, Mp)

    kernel = partial(_stacker_kernel, hidden_dtype=hidden_dtype)
    row_in = pl.BlockSpec((FEAT_ROWS, tm), lambda i: (0, i))
    row_out = pl.BlockSpec((2, tm), lambda i: (0, i))

    out = pl.pallas_call(
        kernel,
        out_shape=jax.ShapeDtypeStruct((2, Mp), jnp.float32),
        grid_spec=pltpu.PrefetchScalarGridSpec(
            num_scalar_prefetch=0,
            grid=(Mp // tm,),
            in_specs=[
                row_in,                                               # X
                pl.BlockSpec((HTOT, FEAT_ROWS), lambda i: (0, 0)),    # W1 packed
                pl.BlockSpec((2, HTOT), lambda i: (0, 0)),            # W2 packed
            ],
            out_specs=row_out,
        ),
        compiler_params=pltpu.CompilerParams(
            dimension_semantics=("parallel",)),
    )(x, w1, w2)

    desc_out = out[0, :M].reshape(logits1.shape)
    men_out = out[1, :M].reshape(logits0.shape)
    return desc_out, men_out


# ------------------------------ reference ------------------------------------
def _reference_forward(params, logits0, logits1, str_sim, prior):
    P = jax.lax.Precision.HIGHEST

    def mlp(x, w1, b1, w2, b2):
        h = jnp.maximum(jnp.dot(x, w1, precision=P) + b1, 0.0)
        return jnp.dot(h, w2, precision=P) + b2

    prior2d = prior.reshape(str_sim.shape)
    desc_x = jnp.stack([logits0, str_sim, prior2d], 2).reshape(-1, NUM_FEATURES)
    men_x = jnp.stack([logits1, str_sim, prior2d], 2).reshape(-1, NUM_FEATURES)
    desc = mlp(desc_x, *params["desc"]).reshape(logits1.shape)
    men = mlp(men_x, *params["men"]).reshape(logits0.shape)
    return desc, men


# -------------------------------- driver -------------------------------------
if __name__ == "__main__":
    key = jax.random.PRNGKey(0)
    kp, kd = jax.random.split(key)
    params = init_stacker_params(kp)
    packed = pack_stacker_params(params)          # packed once, outside jit

    def run_check(B, N, subkey, hidden_dtype, tol):
        k0, k1, k2, k3 = jax.random.split(subkey, 4)
        logits0 = jax.random.normal(k0, (B, N), jnp.float32)
        logits1 = jax.random.normal(k1, (B, N), jnp.float32)
        str_sim = jax.random.normal(k2, (B, N), jnp.float32)
        prior = jax.random.normal(k3, (B * N,), jnp.float32)

        desc_res, men_res = stacker_forward(
            packed, logits0, logits1, str_sim, prior, hidden_dtype=hidden_dtype)
        jax.block_until_ready((desc_res, men_res))

        desc_ref, men_ref = _reference_forward(
            params, logits0, logits1, str_sim, prior)
        assert desc_res.shape == desc_ref.shape
        assert men_res.shape == men_ref.shape
        err_d = float(jnp.max(jnp.abs(desc_res - desc_ref)))
        err_m = float(jnp.max(jnp.abs(men_res - men_ref)))
        assert err_d <= tol, f"desc mismatch: max abs err {err_d} > {tol}"
        assert err_m <= tol, f"men mismatch: max abs err {err_m} > {tol}"

    # small shape (single grid step) and a larger one (2 tiles, padded tail)
    run_check(2, 16, kd, jnp.float32, 2e-4)
    run_check(4, 333, jax.random.fold_in(kd, 1), jnp.float32, 2e-4)
    # bf16 hidden-intermediate path (v6e/v7x optimization), looser tolerance
    run_check(4, 333, jax.random.fold_in(kd, 2), jnp.bfloat16, 2e-2)

    print("KERNEL_OK")
</pallas_src>

<mosaic_0001>
module attributes {stable_mosaic.version = 11 : i64} {
  func.func @_stacker_kernel(%arg0: i32, %arg1: memref<8x128xf32, #tpu.memory_space<vmem>>, %arg2: memref<256x8xf32, #tpu.memory_space<vmem>>, %arg3: memref<2x256xf32, #tpu.memory_space<vmem>>, %arg4: memref<2x128xf32, #tpu.memory_space<vmem>>) attributes {dimension_semantics = [#tpu.dimension_semantics<parallel>], iteration_bounds = array<i64: 1>, scalar_prefetch = 0 : i64, scratch_operands = 0 : i64, tpu.core_type = #tpu.core_type<tc>, window_params = [{transform_indices = @transform_0, window_bounds = array<i64: 8, 128>}, {pipeline_mode = #tpu.pipeline_mode<synchronous>, transform_indices = @transform_1, window_bounds = array<i64: 256, 8>}, {pipeline_mode = #tpu.pipeline_mode<synchronous>, transform_indices = @transform_2, window_bounds = array<i64: 2, 256>}, {transform_indices = @transform_3, window_bounds = array<i64: 2, 128>}]} {
    %c0 = arith.constant 0 : index
    %c0_0 = arith.constant 0 : index
    %0 = vector.load %arg2[%c0, %c0_0] : memref<256x8xf32, #tpu.memory_space<vmem>>, vector<256x8xf32>
    %c0_1 = arith.constant 0 : index
    %c0_2 = arith.constant 0 : index
    %1 = vector.load %arg1[%c0_1, %c0_2] : memref<8x128xf32, #tpu.memory_space<vmem>>, vector<8x128xf32>
    %cst = arith.constant dense<0.000000e+00> : vector<256x128xf32>
    %2 = tpu.matmul %0, %1, %cst {dimension_numbers = #tpu.dot_dimension_numbers<[1], [0], [0], [1], [0, 0, 1, 1], [], []>} : vector<256x8xf32>, vector<8x128xf32>, vector<256x128xf32> -> vector<256x128xf32>
    %cst_3 = arith.constant 0.000000e+00 : f32
    %3 = vector.broadcast %cst_3 : f32 to vector<256x128xf32>
    %4 = arith.maximumf %2, %3 : vector<256x128xf32>
    %c0_4 = arith.constant 0 : index
    %c0_5 = arith.constant 0 : index
    %5 = vector.load %arg3[%c0_4, %c0_5] : memref<2x256xf32, #tpu.memory_space<vmem>>, vector<2x256xf32>
    %cst_6 = arith.constant dense<0.000000e+00> : vector<2x128xf32>
    %6 = tpu.matmul %5, %4, %cst_6 {dimension_numbers = #tpu.dot_dimension_numbers<[1], [0], [0], [1], [0, 0, 1, 1], [], []>} : vector<2x256xf32>, vector<256x128xf32>, vector<2x128xf32> -> vector<2x128xf32>
    %c0_7 = arith.constant 0 : index
    %c0_8 = arith.constant 0 : index
    %7 = vector.load %arg4[%c0_7, %c0_8] : memref<2x128xf32, #tpu.memory_space<vmem>>, vector<2x128xf32>
    tpu.vector_store %arg4[%c0_7, %c0_8], %6 {strides = array<i32>} : memref<2x128xf32, #tpu.memory_space<vmem>>, vector<2x128xf32>,
    return
  }
  func.func @transform_0(%arg0: i32) -> (i32, i32) {
    %c0_i32 = arith.constant 0 : i32
    %c0_i32_0 = arith.constant 0 : i32
    return %c0_i32, %arg0 : i32, i32
  }
  func.func @transform_1(%arg0: i32) -> (i32, i32) {
    %c0_i32 = arith.constant 0 : i32
    %c0_i32_0 = arith.constant 0 : i32
    %c0_i32_1 = arith.constant 0 : i32
    return %c0_i32, %c0_i32_0 : i32, i32
  }
  func.func @transform_2(%arg0: i32) -> (i32, i32) {
    %c0_i32 = arith.constant 0 : i32
    %c0_i32_0 = arith.constant 0 : i32
    %c0_i32_1 = arith.constant 0 : i32
    return %c0_i32, %c0_i32_0 : i32, i32
  }
  func.func @transform_3(%arg0: i32) -> (i32, i32) {
    %c0_i32 = arith.constant 0 : i32
    %c0_i32_0 = arith.constant 0 : i32
    return %c0_i32, %arg0 : i32, i32
  }
}

</mosaic_0001>

<llo_original>
// kernel: squeeze.3
$region0: #{squeeze.3}
  %s0 = inlined_call_operand.vmem [shape: f32[32], index: 0, kind: input, shape index: {}]
  %s1 = inlined_call_operand.hbm [shape: f32[2,16], index: 1, kind: output, shape index: {}]
  $region1: #{squeeze.3} parent=0
    #allocation0 [shape = 'u8[1024]{0}', space=vmem, size = 0x400, scoped, tag = 'operand span for operand 1']
    #allocation1 [shape = 's32[1]{0}', space=sflag, size = 0x4, scoped, tag = 'scoped memory for squeeze.3']
    #allocation2 [shape = 'u8[4096]{0}', space=vmem, size = 0x1000, scoped, tag = 'scoped mem for output reshape']
    #allocation3 [shape = 'u8[4096]{0}', space=vmem, size = 0x1000, scoped, tag = 'scoped mem for input reshape']
    %2 = vsyncpa [#allocation1], 0
    %s4 = ssub.s32 2, 1
    %v5 = vld [vmem:[%s0] sm:%s4]
    %6 = vst [vmem:[#allocation3] sm:%s4] %v5
    %v7 = vld [vmem:[#allocation3] sm:$0x1]
    %vm8 = vcmask 130048
    %9 = vst.msk [vmem:[#allocation2] sm:$0x1] %vm8, %v7
    %v10 = vld [vmem:[#allocation3] sm:$0x1]
    %11 = vrot.lane.b32.xlu0 %v10, 112
    %v12 = vpop.permute.xlu0 %11
    %vm13 = vcmask 130048
    %s14 = scalar_lea.vmem [#allocation2], 1
    %15 = vst.msk [vmem:[%s14] sm:$0x1] %vm13, %v12
    %s17 = ssub.s32 4, 1
    %v18 = vld [vmem:[#allocation2] sm:%s17]
    %s20 = ssub.s32 4, 1
    %21 = vst [vmem:[#allocation0] sm:%s20] %v18
    %23 = vsyncadd [#allocation1], 0
    %s25 = sshll.u32 [#allocation0], 4
    %s26 = int_to_ptr.vmem [resolvable:$true] %s25
    %s27 = sshll.u32 %s1, 4
    %s28 = int_to_ptr.hbm [resolvable:$true] %s27
    %30 = dma.vmem_to_hbm [thread:$0]  %s26, 32, %s28, [#allocation1]
    %32 = dma.done [#allocation1], 32
    %33 = vsyncpa [#allocation1], 1

// kernel: stacker_forward.1
$region0: #{stacker_forward.1}
  #allocation0 [shape = 'u32[]', space=smem, size = 0x4, offset = 0x4, fixed_abs, tag = 'smem constant byte address 0x4 - core index']
  #allocation1 [shape = 'u32[72,128]{1,0:T(1,128)}', space=vmem, size = 0x9000, scoped, tag = 'internal scratch']
  %s0 = inlined_call_operand.vmem [shape: f32[8,128], index: 0, kind: input, shape index: {}]
  %s1 = inlined_call_operand.vmem [shape: f32[256,8], index: 1, kind: input, shape index: {}]
  %s2 = inlined_call_operand.vmem [shape: f32[2,256], index: 2, kind: input, shape index: {}]
  %s3 = inlined_call_operand.vmem [shape: f32[2,128], index: 3, kind: output, shape index: {}]
  %s4 = sld [smem:[#allocation0]]
  $region22: #{stacker_forward.1} parent=0
    _
  %s6 = ssub.s32 1, %s4
  %s7 = scalar_select 0, %s6, %s4
  // Predicated region
  $region2: #{stacker_forward.1} parent=0 // pred_check
    _
  $region3: #{stacker_forward.1} parent=0 // pred_check_branch
    %9 = sbr.rel (0) target = $region5
  $region4: #{stacker_forward.1} parent=0 // pred_region
    _
  $region5: #{stacker_forward.1} parent=0 // pred_fallthru
    _
  // Predicated region
  $region6: #{stacker_forward.1} parent=0 // pred_check
    _
  $region7: #{stacker_forward.1} parent=0 // pred_check_branch
    %11 = sbr.rel (0) target = $region9
  $region8: #{stacker_forward.1} parent=0 // pred_region
    _
  $region9: #{stacker_forward.1} parent=0 // pred_fallthru
    _
  // Predicated region
  $region10: #{stacker_forward.1} parent=0 // pred_check
    _
  $region11: #{stacker_forward.1} parent=0 // pred_check_branch
    %13 = sbr.rel (0) target = $region13
  $region12: #{stacker_forward.1} parent=0 // pred_region
    _
  $region13: #{stacker_forward.1} parent=0 // pred_fallthru
    _
  %v14 = vld [vmem:[%s1] sm:$0xff]
  %v15 = vld [vmem:[%s1 + $0x8] sm:$0xff]
  %v16 = vld [vmem:[%s1 + $0x10] sm:$0xff]
  %v17 = vld [vmem:[%s1 + $0x18] sm:$0xff]
  %v18 = vld [vmem:[%s1 + $0x20] sm:$0xff]
  %v19 = vld [vmem:[%s1 + $0x28] sm:$0xff]
  %v20 = vld [vmem:[%s1 + $0x30] sm:$0xff]
  %v21 = vld [vmem:[%s1 + $0x38] sm:$0xff]
  %v22 = vld [vmem:[%s1 + $0x40] sm:$0xff]
  %v23 = vld [vmem:[%s1 + $0x48] sm:$0xff]
  %v24 = vld [vmem:[%s1 + $0x50] sm:$0xff]
  %v25 = vld [vmem:[%s1 + $0x58] sm:$0xff]
  %v26 = vld [vmem:[%s1 + $0x60] sm:$0xff]
  %v27 = vld [vmem:[%s1 + $0x68] sm:$0xff]
  %v28 = vld [vmem:[%s1 + $0x70] sm:$0xff]
  %v29 = vld [vmem:[%s1 + $0x78] sm:$0xff]
  %v30 = vld [vmem:[%s1 + $0x80] sm:$0xff]
  %v31 = vld [vmem:[%s1 + $0x88] sm:$0xff]
  %v32 = vld [vmem:[%s1 + $0x90] sm:$0xff]
  %v33 = vld [vmem:[%s1 + $0x98] sm:$0xff]
  %v34 = vld [vmem:[%s1 + $0xa0] sm:$0xff]
  %v35 = vld [vmem:[%s1 + $0xa8] sm:$0xff]
  %v36 = vld [vmem:[%s1 + $0xb0] sm:$0xff]
  %v37 = vld [vmem:[%s1 + $0xb8] sm:$0xff]
  %v38 = vld [vmem:[%s1 + $0xc0] sm:$0xff]
  %v39 = vld [vmem:[%s1 + $0xc8] sm:$0xff]
  %v40 = vld [vmem:[%s1 + $0xd0] sm:$0xff]
  %v41 = vld [vmem:[%s1 + $0xd8] sm:$0xff]
  %v42 = vld [vmem:[%s1 + $0xe0] sm:$0xff]
  %v43 = vld [vmem:[%s1 + $0xe8] sm:$0xff]
  %v44 = vld [vmem:[%s1 + $0xf0] sm:$0xff]
  %v45 = vld [vmem:[%s1 + $0xf8] sm:$0xff]
  %v46 = vld [vmem:[%s0] sm:$0xff]
  %vm47 = vcmask 64512
  %v49 = vsel %vm47, %v14, 0
  %v52 = vsel %vm47, %v15, 0
  %v55 = vsel %vm47, %v16, 0
  %v58 = vsel %vm47, %v17, 0
  %v61 = vsel %vm47, %v18, 0
  %v64 = vsel %vm47, %v19, 0
  %v67 = vsel %vm47, %v20, 0
  %v70 = vsel %vm47, %v21, 0
  %v73 = vsel %vm47, %v22, 0
  %v76 = vsel %vm47, %v23, 0
  %v79 = vsel %vm47, %v24, 0
  %v82 = vsel %vm47, %v25, 0
  %v85 = vsel %vm47, %v26, 0
  %v88 = vsel %vm47, %v27, 0
  %v91 = vsel %vm47, %v28, 0
  %v94 = vsel %vm47, %v29, 0
  %v97 = vsel %vm47, %v30, 0
  %v100 = vsel %vm47, %v31, 0
  %v103 = vsel %vm47, %v32, 0
  %v106 = vsel %vm47, %v33, 0
  %v109 = vsel %vm47, %v34, 0
  %v112 = vsel %vm47, %v35, 0
  %v115 = vsel %vm47, %v36, 0
  %v118 = vsel %vm47, %v37, 0
  %v121 = vsel %vm47, %v38, 0
  %v124 = vsel %vm47, %v39, 0
  %v127 = vsel %vm47, %v40, 0
  %v130 = vsel %vm47, %v41, 0
  %v133 = vsel %vm47, %v42, 0
  %v136 = vsel %vm47, %v43, 0
  %v139 = vsel %vm47, %v44, 0
  %v142 = vsel %vm47, %v45, 0
  %144 = vmatpush.msra.mxu0 0.0
  %145 = vmatpush.msra.mxu0 0.0
  %146 = vmatpush.msra.mxu0 0.0
  %147 = vmatpush.msra.mxu0 0.0
  %148 = vmatpush.msra.mxu0 0.0
  %149 = vmatpush.msra.mxu0 0.0
  %150 = vmatpush.msra.mxu0 0.0
  %151 = vmatpush.msra.mxu0 0.0
  %152 = vmatpush.msra.mxu0 0.0
  %153 = vmatpush.msra.mxu0 0.0
  %154 = vmatpush.msra.mxu0 0.0
  %155 = vmatpush.msra.mxu0 0.0
  %156 = vmatpush.msra.mxu0 0.0
  %157 = vmatpush.msra.mxu0 0.0
  %158 = vmatpush.msra.mxu0 0.0
  %159 = vmatpush.msra.mxu0 %v46
  %160 = vmatmul.f32.gmra.mxu0 %v49
  %v161 = vpop.f32.mrf.mxu0
  %v162 = vadd.f32 0.0, %v161
  %163 = vmatmul.f32.gmra.mxu0 %v52
  %v164 = vpop.f32.mrf.mxu0
  %v165 = vadd.f32 0.0, %v164
  %166 = vmatmul.f32.gmra.mxu0 %v55
  %v167 = vpop.f32.mrf.mxu0
  %v168 = vadd.f32 0.0, %v167
  %169 = vmatmul.f32.gmra.mxu0 %v58
  %v170 = vpop.f32.mrf.mxu0
  %v171 = vadd.f32 0.0, %v170
  %172 = vmatmul.f32.gmra.mxu0 %v61
  %v173 = vpop.f32.mrf.mxu0
  %v174 = vadd.f32 0.0, %v173
  %175 = vmatmul.f32.gmra.mxu0 %v64
  %v176 = vpop.f32.mrf.mxu0
  %v177 = vadd.f32 0.0, %v176
  %178 = vmatmul.f32.gmra.mxu0 %v67
  %v179 = vpop.f32.mrf.mxu0
  %v180 = vadd.f32 0.0, %v179
  %181 = vmatmul.f32.gmra.mxu0 %v70
  %v182 = vpop.f32.mrf.mxu0
  %v183 = vadd.f32 0.0, %v182
  %184 = vmatmul.f32.gmra.mxu0 %v73
  %v185 = vpop.f32.mrf.mxu0
  %v186 = vadd.f32 0.0, %v185
  %187 = vmatmul.f32.gmra.mxu0 %v76
  %v188 = vpop.f32.mrf.mxu0
  %v189 = vadd.f32 0.0, %v188
  %190 = vmatmul.f32.gmra.mxu0 %v79
  %v191 = vpop.f32.mrf.mxu0
  %v192 = vadd.f32 0.0, %v191
  %193 = vmatmul.f32.gmra.mxu0 %v82
  %v194 = vpop.f32.mrf.mxu0
  %v195 = vadd.f32 0.0, %v194
  %196 = vmatmul.f32.gmra.mxu0 %v85
  %v197 = vpop.f32.mrf.mxu0
  %v198 = vadd.f32 0.0, %v197
  %199 = vmatmul.f32.gmra.mxu0 %v88
  %v200 = vpop.f32.mrf.mxu0
  %v201 = vadd.f32 0.0, %v200
  %202 = vmatmul.f32.gmra.mxu0 %v91
  %v203 = vpop.f32.mrf.mxu0
  %v204 = vadd.f32 0.0, %v203
  %205 = vmatmul.f32.gmra.mxu0 %v94
  %v206 = vpop.f32.mrf.mxu0
  %v207 = vadd.f32 0.0, %v206
  %208 = vmatmul.f32.gmra.mxu0 %v97
  %v209 = vpop.f32.mrf.mxu0
  %v210 = vadd.f32 0.0, %v209
  %211 = vmatmul.f32.gmra.mxu0 %v100
  %v212 = vpop.f32.mrf.mxu0
  %v213 = vadd.f32 0.0, %v212
  %214 = vmatmul.f32.gmra.mxu0 %v103
  %v215 = vpop.f32.mrf.mxu0
  %v216 = vadd.f32 0.0, %v215
  %217 = vmatmul.f32.gmra.mxu0 %v106
  %v218 = vpop.f32.mrf.mxu0
  %v219 = vadd.f32 0.0, %v218
  %220 = vmatmul.f32.gmra.mxu0 %v109
  %v221 = vpop.f32.mrf.mxu0
  %v222 = vadd.f32 0.0, %v221
  %223 = vmatmul.f32.gmra.mxu0 %v112
  %v224 = vpop.f32.mrf.mxu0
  %v225 = vadd.f32 0.0, %v224
  %226 = vmatmul.f32.gmra.mxu0 %v115
  %v227 = vpop.f32.mrf.mxu0
  %v228 = vadd.f32 0.0, %v227
  %229 = vmatmul.f32.gmra.mxu0 %v118
  %v230 = vpop.f32.mrf.mxu0
  %v231 = vadd.f32 0.0, %v230
  %232 = vmatmul.f32.gmra.mxu0 %v121
  %v233 = vpop.f32.mrf.mxu0
  %v234 = vadd.f32 0.0, %v233
  %235 = vmatmul.f32.gmra.mxu0 %v124
  %v236 = vpop.f32.mrf.mxu0
  %v237 = vadd.f32 0.0, %v236
  %238 = vmatmul.f32.gmra.mxu0 %v127
  %v239 = vpop.f32.mrf.mxu0
  %v240 = vadd.f32 0.0, %v239
  %241 = vmatmul.f32.gmra.mxu0 %v130
  %v242 = vpop.f32.mrf.mxu0
  %v243 = vadd.f32 0.0, %v242
  %244 = vmatmul.f32.gmra.mxu0 %v133
  %v245 = vpop.f32.mrf.mxu0
  %v246 = vadd.f32 0.0, %v245
  %247 = vmatmul.f32.gmra.mxu0 %v136
  %v248 = vpop.f32.mrf.mxu0
  %v249 = vadd.f32 0.0, %v248
  %250 = vmatmul.f32.gmra.mxu0 %v139
  %v251 = vpop.f32.mrf.mxu0
  %v252 = vadd.f32 0.0, %v251
  %253 = vmatmul.f32.gmra.mxu0 %v142
  %v254 = vpop.f32.mrf.mxu0
  %v255 = vadd.f32 0.0, %v254
  %256 = vdwg.mxu0
  %v257 = vmax.f32 %v162, 0.0
  %v258 = vmax.f32 %v165, 0.0
  %v259 = vmax.f32 %v168, 0.0
  %v260 = vmax.f32 %v171, 0.0
  %v261 = vmax.f32 %v174, 0.0
  %v262 = vmax.f32 %v177, 0.0
  %v263 = vmax.f32 %v180, 0.0
  %v264 = vmax.f32 %v183, 0.0
  %v265 = vmax.f32 %v186, 0.0
  %v266 = vmax.f32 %v189, 0.0
  %v267 = vmax.f32 %v192, 0.0
  %v268 = vmax.f32 %v195, 0.0
  %v269 = vmax.f32 %v198, 0.0
  %v270 = vmax.f32 %v201, 0.0
  %v271 = vmax.f32 %v204, 0.0
  %v272 = vmax.f32 %v207, 0.0
  %v273 = vmax.f32 %v210, 0.0
  %v274 = vmax.f32 %v213, 0.0
  %v275 = vmax.f32 %v216, 0.0
  %v276 = vmax.f32 %v219, 0.0
  %v277 = vmax.f32 %v222, 0.0
  %v278 = vmax.f32 %v225, 0.0
  %v279 = vmax.f32 %v228, 0.0
  %v280 = vmax.f32 %v231, 0.0
  %v281 = vmax.f32 %v234, 0.0
  %v282 = vmax.f32 %v237, 0.0
  %v283 = vmax.f32 %v240, 0.0
  %v284 = vmax.f32 %v243, 0.0
  %v285 = vmax.f32 %v246, 0.0
  %v286 = vmax.f32 %v249, 0.0
  %v287 = vmax.f32 %v252, 0.0
  %v288 = vmax.f32 %v255, 0.0
  %v289 = vld [vmem:[%s2] sm:$0xf]
  %291 = vst [vmem:[#allocation1] ss:$4 sm:$0xff] %v289
  %v292 = vld.sshfl [vmem:[#allocation1] sm:$0xff pattern:$0x73625140]
  %v293 = vld.sshfl [vmem:[#allocation1 + $0x8] sm:$0xff pattern:$0x73625140]
  %296 = vmatpush.msra.mxu0 %v272
  %297 = vmatpush.msra.mxu0 %v271
  %298 = vmatpush.msra.mxu0 %v270
  %299 = vmatpush.msra.mxu0 %v269
  %300 = vmatpush.msra.mxu0 %v268
  %301 = vmatpush.msra.mxu0 %v267
  %302 = vmatpush.msra.mxu0 %v266
  %303 = vmatpush.msra.mxu0 %v265
  %304 = vmatpush.msra.mxu0 %v264
  %305 = vmatpush.msra.mxu0 %v263
  %306 = vmatpush.msra.mxu0 %v262
  %307 = vmatpush.msra.mxu0 %v261
  %308 = vmatpush.msra.mxu0 %v260
  %309 = vmatpush.msra.mxu0 %v259
  %310 = vmatpush.msra.mxu0 %v258
  %311 = vmatpush.msra.mxu0 %v257
  %312 = vmatmul.f32.gmra.mxu0 %v292
  %v313 = vpop.f32.mrf.mxu0
  %v314 = vadd.f32 0.0, %v313
  %315 = vdwg.mxu0
  %316 = vmatpush.msra.mxu0 %v288
  %317 = vmatpush.msra.mxu0 %v287
  %318 = vmatpush.msra.mxu0 %v286
  %319 = vmatpush.msra.mxu0 %v285
  %320 = vmatpush.msra.mxu0 %v284
  %321 = vmatpush.msra.mxu0 %v283
  %322 = vmatpush.msra.mxu0 %v282
  %323 = vmatpush.msra.mxu0 %v281
  %324 = vmatpush.msra.mxu0 %v280
  %325 = vmatpush.msra.mxu0 %v279
  %326 = vmatpush.msra.mxu0 %v278
  %327 = vmatpush.msra.mxu0 %v277
  %328 = vmatpush.msra.mxu0 %v276
  %329 = vmatpush.msra.mxu0 %v275
  %330 = vmatpush.msra.mxu0 %v274
  %331 = vmatpush.msra.mxu0 %v273
  %332 = vmatmul.f32.gmra.mxu0 %v293
  %v333 = vpop.f32.mrf.mxu0
  %v334 = vadd.f32 %v314, %v333
  %335 = vdwg.mxu0
  %336 = vst [vmem:[%s3] sm:$0x3] %v334
  // Predicated region
  $region14: #{stacker_forward.1} parent=0 // pred_check
    _
  $region15: #{stacker_forward.1} parent=0 // pred_check_branch
    %338 = sbr.rel (0) target = $region17
  $region16: #{stacker_forward.1} parent=0 // pred_region
    _
  $region17: #{stacker_forward.1} parent=0 // pred_fallthru
    _
  // Predicated region
  $region18: #{stacker_forward.1} parent=0 // pred_check
    _
  $region19: #{stacker_forward.1} parent=0 // pred_check_branch
    %340 = sbr.rel (0) target = $region21
  $region20: #{stacker_forward.1} parent=0 // pred_region
    _
  $region21: #{stacker_forward.1} parent=0 // pred_fallthru
    _

</llo_original>
